<compile_context>
chip_gen: v5e
topology: v5e:2x2
jax: 0.10.0
libtpu: 0.0.40
codegen_flags: <defaults>
</compile_context>

<pallas_src>
import functools
import math

import jax
import jax.numpy as jnp
from jax import lax
from jax.experimental import pallas as pl
from jax.experimental.pallas import tpu as pltpu

NUM_CLASSES = 2
_BN_EPS = 1e-5


def _round_up(x, m):
    return ((x + m - 1) // m) * m


# --------------------------------------------------------------------------
# Pallas kernels: full-K matmul with fused bias (+ residual) + optional ReLU
# --------------------------------------------------------------------------
def _matmul_bias_kernel(a_ref, b_ref, bias_ref, o_ref, *, relu):
    r = jnp.dot(a_ref[...], b_ref[...], preferred_element_type=jnp.float32)
    r = r + bias_ref[...]                       # (TM,TN) + (1,TN) broadcast, f32
    if relu:
        r = jnp.maximum(r, 0.0)
    o_ref[...] = r.astype(o_ref.dtype)


def _matmul_bias_res_kernel(a_ref, b_ref, bias_ref, res_ref, o_ref, *, relu):
    r = jnp.dot(a_ref[...], b_ref[...], preferred_element_type=jnp.float32)
    r = r + bias_ref[...] + res_ref[...].astype(jnp.float32)
    if relu:
        r = jnp.maximum(r, 0.0)
    o_ref[...] = r.astype(o_ref.dtype)


def _choose_tm(M):
    """Adaptive M tile: 128 for big M, otherwise the (16-rounded) real M."""
    if M >= 128:
        return 128, _round_up(M, 128)
    Mp = _round_up(max(M, 16), 16)
    return Mp, Mp


def _mm_impl(a, w, b, res, *, relu, out_dtype, n_out):
    """out[:M, :n_out] = act(a @ w + b (+ res)).

    a:   (M, K)  activations (any float dtype, cast to bf16)
    w:   (Kp, Np) bf16, pre-padded to 128-multiples
    b:   (1, Np)  f32,  pre-padded
    res: (M, n_out) or None (fused residual add)
    """
    M, K = a.shape
    Kp, Np = w.shape
    TM, Mp = _choose_tm(M)
    TN = 256 if Np % 256 == 0 else 128

    a = a.astype(jnp.bfloat16)
    if (Mp != M) or (Kp != K):
        a = jnp.pad(a, ((0, Mp - M), (0, Kp - K)))

    in_specs = [
        pl.BlockSpec((TM, Kp), lambda j, i: (i, 0)),   # A: full-K row block
        pl.BlockSpec((Kp, TN), lambda j, i: (0, j)),   # B: full-K col block
        pl.BlockSpec((1, TN), lambda j, i: (0, j)),    # bias
    ]
    args = [a, w, b]

    if res is not None:
        res = res.astype(jnp.bfloat16)
        Mr, Nr = res.shape
        if (Mr != Mp) or (Nr != Np):
            res = jnp.pad(res, ((0, Mp - Mr), (0, Np - Nr)))
        in_specs.append(pl.BlockSpec((TM, TN), lambda j, i: (i, j)))
        args.append(res)
        kernel = functools.partial(_matmul_bias_res_kernel, relu=relu)
    else:
        kernel = functools.partial(_matmul_bias_kernel, relu=relu)

    out = pl.pallas_call(
        kernel,
        out_shape=jax.ShapeDtypeStruct((Mp, Np), out_dtype),
        grid_spec=pltpu.PrefetchScalarGridSpec(
            num_scalar_prefetch=0,
            grid=(Np // TN, Mp // TM),     # N-tile axis outermost (megacore)
            in_specs=in_specs,
            out_specs=pl.BlockSpec((TM, TN), lambda j, i: (i, j)),
        ),
        compiler_params=pltpu.CompilerParams(
            dimension_semantics=("parallel", "parallel")),
    )(*args)
    return out[:M, :n_out]


@functools.partial(jax.jit, static_argnames=("relu", "out_dtype", "n_out"))
def _mm(a, w, b, *, relu, out_dtype, n_out):
    return _mm_impl(a, w, b, None, relu=relu, out_dtype=out_dtype, n_out=n_out)


@functools.partial(jax.jit, static_argnames=("relu", "out_dtype", "n_out"))
def _mm_res(a, w, b, res, *, relu, out_dtype, n_out):
    return _mm_impl(a, w, b, res, relu=relu, out_dtype=out_dtype, n_out=n_out)


def matmul_bias_act(a, w, b, *, relu, n_out, residual=None,
                    out_dtype=jnp.bfloat16):
    if residual is None:
        return _mm(a, w, b, relu=relu, out_dtype=out_dtype, n_out=n_out)
    return _mm_res(a, w, b, residual, relu=relu, out_dtype=out_dtype,
                   n_out=n_out)


# --------------------------------------------------------------------------
# Conv / pool glue (im2col + Pallas matmul)
# --------------------------------------------------------------------------
def _im2col(x, kh, kw, stride, pad):
    """x: (B,H,W,C) -> (B,oh,ow, kh*kw*C), K index = (i*kw + j)*C + c.

    Channels innermost => the concat is cheap and the A-tile DMA is lane-dense.
    """
    if pad:
        x = jnp.pad(x, ((0, 0), (pad, pad), (pad, pad), (0, 0)))
    B, H, W, C = x.shape
    oh = (H - kh) // stride + 1
    ow = (W - kw) // stride + 1
    cols = []
    for i in range(kh):
        for j in range(kw):
            cols.append(x[:, i:i + stride * oh:stride,
                          j:j + stride * ow:stride, :])
    if len(cols) == 1:
        return cols[0]
    return jnp.concatenate(cols, axis=-1)


def conv_bn(x, p, *, stride, pad, relu, residual=None,
            out_dtype=jnp.bfloat16):
    """Conv2d(no bias) + folded BatchNorm (+ residual) (+ ReLU). x: NHWC bf16."""
    k = p["k"]
    if k == 1 and stride == 1 and pad == 0:
        patches = x
    else:
        patches = _im2col(x, k, k, stride, pad)
    B, oh, ow, K = patches.shape
    a = patches.reshape(B * oh * ow, K)
    res2d = None
    if residual is not None:
        res2d = residual.reshape(B * oh * ow, p["n"])
    out = matmul_bias_act(a, p["w"], p["b"], relu=relu, n_out=p["n"],
                          residual=res2d, out_dtype=out_dtype)
    return out.reshape(B, oh, ow, p["n"])


def maxpool_3x3_s2_p1(x):
    # Matches nn.MaxPool2d(kernel_size=3, stride=2, padding=1) (pad = -inf).
    neg_inf = jnp.asarray(-jnp.inf, dtype=x.dtype)
    return lax.reduce_window(
        x, neg_inf, lax.max,
        window_dimensions=(1, 3, 3, 1),
        window_strides=(1, 2, 2, 1),
        padding=((0, 0), (1, 1), (1, 1), (0, 0)))


# --------------------------------------------------------------------------
# Deterministic parameter construction (ResNet-50 shapes)
# --------------------------------------------------------------------------
def _make_conv_bn(key, cin, cout, k):
    kw_key, g_key, b_key, m_key, v_key = jax.random.split(key, 5)
    w = jax.random.normal(kw_key, (cout, cin, k, k), jnp.float32) * \
        math.sqrt(2.0 / (cin * k * k))
    gamma = jax.random.uniform(g_key, (cout,), minval=0.8, maxval=1.2)
    beta = 0.05 * jax.random.normal(b_key, (cout,))
    mean = 0.05 * jax.random.normal(m_key, (cout,))
    var = jax.random.uniform(v_key, (cout,), minval=0.8, maxval=1.2)
    scale = gamma / jnp.sqrt(var + _BN_EPS)
    # Fold BN into conv:  y = (W*scale) * x + (beta - mean*scale)
    w_f = w * scale[:, None, None, None]
    # Lane-dense flattening: K index = (i*kw + j)*cin + c
    w2 = jnp.transpose(w_f, (2, 3, 1, 0)).reshape(k * k * cin, cout)
    bias = beta - mean * scale
    K, N = w2.shape
    Kp, Np = _round_up(K, 128), _round_up(N, 128)
    w2 = jnp.pad(w2, ((0, Kp - K), (0, Np - N))).astype(jnp.bfloat16)
    bias = jnp.pad(bias, (0, Np - N)).astype(jnp.float32).reshape(1, Np)
    return dict(w=w2, b=bias, k=k, n=cout)


def make_resnet50_params(base_key, num_classes):
    counter = [0]

    def nk():
        counter[0] += 1
        return jax.random.fold_in(base_key, counter[0])

    params = {}
    params["conv1"] = _make_conv_bn(nk(), 3, 64, 7)

    layers_cfg = [(64, 3, 1), (128, 4, 2), (256, 6, 2), (512, 3, 2)]
    inplanes = 64
    stages = []
    for planes, blocks, stride in layers_cfg:
        stage = []
        for b in range(blocks):
            s = stride if b == 0 else 1
            block = {
                "stride": s,
                "conv1": _make_conv_bn(nk(), inplanes, planes, 1),
                "conv2": _make_conv_bn(nk(), planes, planes, 3),
                "conv3": _make_conv_bn(nk(), planes, planes * 4, 1),
            }
            if b == 0 and (s != 1 or inplanes != planes * 4):
                block["downsample"] = _make_conv_bn(nk(), inplanes, planes * 4, 1)
            stage.append(block)
            inplanes = planes * 4
        stages.append(stage)
    params["stages"] = stages

    # fc: nn.Linear(2048, num_classes) default init, pre-padded to a lane tile
    bound = 1.0 / math.sqrt(2048)
    fc_w = jax.random.uniform(nk(), (num_classes, 2048),
                              minval=-bound, maxval=bound, dtype=jnp.float32)
    fc_b = jax.random.uniform(nk(), (num_classes,),
                              minval=-bound, maxval=bound, dtype=jnp.float32)
    Np = _round_up(num_classes, 128)
    params["fc_w"] = jnp.pad(fc_w.T, ((0, 0), (0, Np - num_classes))
                             ).astype(jnp.bfloat16)            # (2048, Np)
    params["fc_b"] = jnp.pad(fc_b, (0, Np - num_classes)
                             ).astype(jnp.float32).reshape(1, Np)
    params["fc_n"] = num_classes
    return params


# --------------------------------------------------------------------------
# Forward pass (NucleiClassifier.forward == resnet50 forward with new fc)
# --------------------------------------------------------------------------
def _bottleneck(x, p):
    if "downsample" in p:
        identity = conv_bn(x, p["downsample"], stride=p["stride"], pad=0,
                           relu=False)
    else:
        identity = x
    out = conv_bn(x, p["conv1"], stride=1, pad=0, relu=True)
    out = conv_bn(out, p["conv2"], stride=p["stride"], pad=1, relu=True)
    # Residual add + ReLU fused into conv3's matmul epilogue.
    out = conv_bn(out, p["conv3"], stride=1, pad=0, relu=True,
                  residual=identity)
    return out


def nuclei_classifier_forward(x_nchw, params):
    # layout: accept PyTorch NCHW, compute in NHWC (bf16 activations).
    x = jnp.transpose(x_nchw, (0, 2, 3, 1)).astype(jnp.bfloat16)
    x = conv_bn(x, params["conv1"], stride=2, pad=3, relu=True)
    x = maxpool_3x3_s2_p1(x)
    for stage in params["stages"]:
        for block in stage:
            x = _bottleneck(x, block)
    x = jnp.mean(x.astype(jnp.float32), axis=(1, 2))   # AdaptiveAvgPool2d(1)
    logits = matmul_bias_act(x, params["fc_w"], params["fc_b"],
                             relu=False, n_out=params["fc_n"],
                             out_dtype=jnp.float32)
    return logits


# --------------------------------------------------------------------------
if __name__ == "__main__":
    key = jax.random.PRNGKey(0)
    pkey, xkey = jax.random.split(key)

    params = make_resnet50_params(pkey, NUM_CLASSES)

    # Small input consistent with the module: NCHW, 3 channels (RGB nuclei patch).
    x = jax.random.normal(xkey, (2, 3, 32, 32), dtype=jnp.float32)

    logits = nuclei_classifier_forward(x, params)
    logits = jax.block_until_ready(logits)

    assert logits.shape == (2, NUM_CLASSES)
    assert bool(jnp.all(jnp.isfinite(logits)))
    print("KERNEL_OK")
</pallas_src>

<mosaic_0001>
module attributes {stable_mosaic.version = 11 : i64} {
  func.func @_matmul_bias_kernel(%arg0: i32, %arg1: i32, %arg2: memref<128x256xbf16, #tpu.memory_space<vmem>>, %arg3: memref<256x128xbf16, #tpu.memory_space<vmem>>, %arg4: memref<1x128xf32, #tpu.memory_space<vmem>>, %arg5: memref<128x128xbf16, #tpu.memory_space<vmem>>) attributes {dimension_semantics = [#tpu.dimension_semantics<parallel>, #tpu.dimension_semantics<parallel>], iteration_bounds = array<i64: 1, 4>, scalar_prefetch = 0 : i64, scratch_operands = 0 : i64, tpu.core_type = #tpu.core_type<tc>, window_params = [{transform_indices = @transform_0, window_bounds = array<i64: 128, 256>}, {transform_indices = @transform_1, window_bounds = array<i64: 256, 128>}, {transform_indices = @transform_2, window_bounds = array<i64: 1, 128>}, {transform_indices = @transform_3, window_bounds = array<i64: 128, 128>}]} {
    %c0 = arith.constant 0 : index
    %c0_0 = arith.constant 0 : index
    %0 = vector.load %arg2[%c0, %c0_0] : memref<128x256xbf16, #tpu.memory_space<vmem>>, vector<128x256xbf16>
    %c0_1 = arith.constant 0 : index
    %c0_2 = arith.constant 0 : index
    %1 = vector.load %arg3[%c0_1, %c0_2] : memref<256x128xbf16, #tpu.memory_space<vmem>>, vector<256x128xbf16>
    %cst = arith.constant dense<0.000000e+00> : vector<128x128xf32>
    %2 = tpu.matmul %0, %1, %cst {dimension_numbers = #tpu.dot_dimension_numbers<[1], [0], [0], [1], [0, 0, 1, 1], [], []>} : vector<128x256xbf16>, vector<256x128xbf16>, vector<128x128xf32> -> vector<128x128xf32>
    %c0_3 = arith.constant 0 : index
    %c0_4 = arith.constant 0 : index
    %3 = vector.load %arg4[%c0_3, %c0_4] : memref<1x128xf32, #tpu.memory_space<vmem>>, vector<1x128xf32>
    %4 = vector.broadcast %3 : vector<1x128xf32> to vector<128x128xf32>
    %5 = arith.addf %2, %4 : vector<128x128xf32>
    %cst_5 = arith.constant 0.000000e+00 : f32
    %6 = vector.broadcast %cst_5 : f32 to vector<128x128xf32>
    %7 = arith.maximumf %5, %6 : vector<128x128xf32>
    %8 = arith.truncf %7 : vector<128x128xf32> to vector<128x128xbf16>
    %c0_6 = arith.constant 0 : index
    %c0_7 = arith.constant 0 : index
    %9 = vector.load %arg5[%c0_6, %c0_7] : memref<128x128xbf16, #tpu.memory_space<vmem>>, vector<128x128xbf16>
    tpu.vector_store %arg5[%c0_6, %c0_7], %8 {strides = array<i32>} : memref<128x128xbf16, #tpu.memory_space<vmem>>, vector<128x128xbf16>,
    return
  }
  func.func @transform_0(%arg0: i32, %arg1: i32) -> (i32, i32) {
    %c0_i32 = arith.constant 0 : i32
    %c0_i32_0 = arith.constant 0 : i32
    return %arg1, %c0_i32 : i32, i32
  }
  func.func @transform_1(%arg0: i32, %arg1: i32) -> (i32, i32) {
    %c0_i32 = arith.constant 0 : i32
    %c0_i32_0 = arith.constant 0 : i32
    return %c0_i32, %arg0 : i32, i32
  }
  func.func @transform_2(%arg0: i32, %arg1: i32) -> (i32, i32) {
    %c0_i32 = arith.constant 0 : i32
    %c0_i32_0 = arith.constant 0 : i32
    return %c0_i32, %arg0 : i32, i32
  }
  func.func @transform_3(%arg0: i32, %arg1: i32) -> (i32, i32) {
    %c0_i32 = arith.constant 0 : i32
    return %arg1, %arg0 : i32, i32
  }
}

</mosaic_0001>

<llo_original>
// kernel: _mm.1
$region0: #{_mm.1}
  #allocation0 [shape = 'u32[]', space=smem, size = 0x4, offset = 0x4, fixed_abs, tag = 'smem constant byte address 0x4 - core index']
  #allocation1 [shape = 'u32[72,128]{1,0:T(1,128)}', space=vmem, size = 0x9000, scoped, tag = 'internal scratch']
  %s0 = inlined_call_operand.vmem [shape: bf16[512,256], index: 0, kind: input, shape index: {}]
  %s1 = inlined_call_operand.vmem [shape: bf16[256,128], index: 1, kind: input, shape index: {}]
  %s2 = inlined_call_operand.vmem [shape: f32[1,128], index: 2, kind: input, shape index: {}]
  %s3 = inlined_call_operand.vmem [shape: bf16[512,128], index: 3, kind: output, shape index: {}]
  %s4 = sld [smem:[#allocation0]]
  $region45: #{_mm.1} parent=0
    _
  %s6 = ssub.s32 1, %s4
  %s7 = scalar_select 0, %s6, %s4
  loop: start=0, step=1, limit=6
  $region2: #{_mm.1} parent=0 // loop_pre_header
    _
  $region3: #{_mm.1} parent=0 // loop_header
    %s9 = sphi 0, %s13
    %p10 = scmp.ge.s32.totalorder %s9, 6
    %s16 = sphi 0, %s28
    %s17 = sphi 0, %s24
    %s18 = sphi 0, %s16
    %s19 = sphi 0, %s17
    %s20 = sphi 0, %s18
    %s21 = sphi 0, %s19
    %s31 = sphi 0, %s33
    %s34 = sphi 0, %s31
    %s35 = sphi 0, %s34
    %s51 = sphi 0, %s35
    %s57 = sphi 0, %s59
    %s60 = sphi 0, %s57
    %s61 = sphi 0, %s60
    %s77 = sphi 0, %s61
    %s83 = sphi 0, %s85
    %s86 = sphi 0, %s83
    %s87 = sphi 0, %s86
    %s103 = sphi 0, %s87
    %s111 = sphi 0, %s113
    %s114 = sphi 0, %s111
    %s115 = sphi 0, %s114
    %s131 = sphi 0, %s115
  $region4: #{_mm.1} parent=0 // loop_header_branch
    %12 = sbr.rel (%p10) target = $region8
  $region5: #{_mm.1} parent=0 // loop_body
    %s14 = ssub.s32 %s9, 1
    %s15 = ssub.s32 %s9, 2
    %s22 = sadd.s32 1, %s17
    %p23 = scmp.ge.s32.totalorder %s22, 4
    %s24 = scalar_select %p23, 0, %s22
    %s25 = sadd.s32 1, %s16
    %s26 = scalar_select %p23, %s25, %s16
    %p27 = scmp.ge.s32.totalorder %s26, 1
    %s28 = scalar_select %p27, 0, %s26
    %s29 = ssub.s32 %s17, %s24
    %p30 = scmp.eq.s32.totalorder %s29, 0
    %s32 = sadd.s32 %s31, 1
    %s33 = scalar_select %p30, %s31, %s32
    %p36 = pneg %p30
    %p37 = scmp.eq.s32.totalorder %s9, 3
    %p38 = por %p36, %p37
    %p39 = scmp.ne.s32.totalorder %s31, %s34
    %p40 = scmp.eq.s32.totalorder %s9, 0
    %p41 = por %p39, %p40
    %p42 = scmp.ne.s32.totalorder %s31, %s34
    %p43 = scmp.eq.s32.totalorder %s14, 3
    %p44 = por %p42, %p43
    %p45 = scmp.ne.s32.totalorder %s34, %s35
    %p46 = scmp.eq.s32.totalorder %s14, 0
    %p47 = por %p45, %p46
    %p48 = scmp.ne.s32.totalorder %s34, %s35
    %p49 = scmp.eq.s32.totalorder %s15, 3
    %p50 = por %p48, %p49
    %p52 = scmp.ne.s32.totalorder %s35, %s51
    %p53 = scmp.eq.s32.totalorder %s15, 0
    %p54 = por %p52, %p53
    %s55 = ssub.s32 %s16, %s28
    %p56 = scmp.eq.s32.totalorder %s55, 0
    %s58 = sadd.s32 %s57, 1
    %s59 = scalar_select %p56, %s57, %s58
    %p62 = pneg %p56
    %p63 = scmp.eq.s32.totalorder %s9, 3
    %p64 = por %p62, %p63
    %p65 = scmp.ne.s32.totalorder %s57, %s60
    %p66 = scmp.eq.s32.totalorder %s9, 0
    %p67 = por %p65, %p66
    %p68 = scmp.ne.s32.totalorder %s57, %s60
    %p69 = scmp.eq.s32.totalorder %s14, 3
    %p70 = por %p68, %p69
    %p71 = scmp.ne.s32.totalorder %s60, %s61
    %p72 = scmp.eq.s32.totalorder %s14, 0
    %p73 = por %p71, %p72
    %p74 = scmp.ne.s32.totalorder %s60, %s61
    %p75 = scmp.eq.s32.totalorder %s15, 3
    %p76 = por %p74, %p75
    %p78 = scmp.ne.s32.totalorder %s61, %s77
    %p79 = scmp.eq.s32.totalorder %s15, 0
    %p80 = por %p78, %p79
    %s81 = ssub.s32 %s16, %s28
    %p82 = scmp.eq.s32.totalorder %s81, 0
    %s84 = sadd.s32 %s83, 1
    %s85 = scalar_select %p82, %s83, %s84
    %p88 = pneg %p82
    %p89 = scmp.eq.s32.totalorder %s9, 3
    %p90 = por %p88, %p89
    %p91 = scmp.ne.s32.totalorder %s83, %s86
    %p92 = scmp.eq.s32.totalorder %s9, 0
    %p93 = por %p91, %p92
    %p94 = scmp.ne.s32.totalorder %s83, %s86
    %p95 = scmp.eq.s32.totalorder %s14, 3
    %p96 = por %p94, %p95
    %p97 = scmp.ne.s32.totalorder %s86, %s87
    %p98 = scmp.eq.s32.totalorder %s14, 0
    %p99 = por %p97, %p98
    %p100 = scmp.ne.s32.totalorder %s86, %s87
    %p101 = scmp.eq.s32.totalorder %s15, 3
    %p102 = por %p100, %p101
    %p104 = scmp.ne.s32.totalorder %s87, %s103
    %p105 = scmp.eq.s32.totalorder %s15, 0
    %p106 = por %p104, %p105
    %s107 = ssub.s32 %s17, %s24
    %s108 = ssub.s32 %s16, %s28
    %s109 = sor.u32 %s107, %s108
    %p110 = scmp.eq.s32.totalorder %s109, 0
    %s112 = sadd.s32 %s111, 1
    %s113 = scalar_select %p110, %s111, %s112
    %p116 = pneg %p110
    %p117 = scmp.eq.s32.totalorder %s9, 3
    %p118 = por %p116, %p117
    %p119 = scmp.ne.s32.totalorder %s111, %s114
    %p120 = scmp.eq.s32.totalorder %s9, 0
    %p121 = por %p119, %p120
    %p122 = scmp.ne.s32.totalorder %s111, %s114
    %p123 = scmp.eq.s32.totalorder %s14, 3
    %p124 = por %p122, %p123
    %p125 = scmp.ne.s32.totalorder %s114, %s115
    %p126 = scmp.eq.s32.totalorder %s14, 0
    %p127 = por %p125, %p126
    %p128 = scmp.ne.s32.totalorder %s114, %s115
    %p129 = scmp.eq.s32.totalorder %s15, 3
    %p130 = por %p128, %p129
    %p132 = scmp.ne.s32.totalorder %s115, %s131
    %p133 = scmp.eq.s32.totalorder %s15, 0
    %p134 = por %p132, %p133
    %p135 = scmp.le.s32.totalorder 1, %s9
    %p136 = scmp.lt.s32.totalorder %s9, 5
    %p137 = pnand %p135, %p136
    %p138 = pneg %p137
    // Predicated region
    $region9: #{_mm.1} parent=5 // pred_check
      _
    $region10: #{_mm.1} parent=5 // pred_check_branch
      %140 = sbr.rel (%p137) target = $region12
    $region11: #{_mm.1} parent=5 // pred_region
      %s141 = ssub.s32 %s9, 1
      // Predicated region
      $region13: #{_mm.1} parent=11 // pred_check
        %p142 = pneg %p73
      $region14: #{_mm.1} parent=11 // pred_check_branch
        %144 = sbr.rel (%p142) target = $region16
      $region15: #{_mm.1} parent=11 // pred_region
        %p145 = scmp.lt.s32.totalorder %s18, 0
        %s146 = scalar_select %p145, %s18, 0
        %s147 = smul.addr %s146, 4
        %s148 = scalar_lea.vmem %s1, %s147
      $region16: #{_mm.1} parent=11 // pred_fallthru
        _
      // Predicated region
      $region17: #{_mm.1} parent=11 // pred_check
        %p149 = pneg %p99
      $region18: #{_mm.1} parent=11 // pred_check_branch
        %151 = sbr.rel (%p149) target = $region20
      $region19: #{_mm.1} parent=11 // pred_region
        %p152 = scmp.lt.s32.totalorder %s18, 0
        %s153 = scalar_select %p152, %s18, 0
        %s154 = scalar_lea.vmem %s2, %s153
      $region20: #{_mm.1} parent=11 // pred_fallthru
        _
    $region12: #{_mm.1} parent=5 // pred_fallthru
      _
    %p155 = scmp.lt.s32.totalorder %s9, 4
    // Predicated region
    $region21: #{_mm.1} parent=5 // pred_check
      %p156 = pneg %p155
    $region22: #{_mm.1} parent=5 // pred_check_branch
      %158 = sbr.rel (%p156) target = $region24
    $region23: #{_mm.1} parent=5 // pred_region
      // Predicated region
      $region25: #{_mm.1} parent=23 // pred_check
        %p159 = pneg %p41
      $region26: #{_mm.1} parent=23 // pred_check_branch
        %161 = sbr.rel (%p159) target = $region28
      $region27: #{_mm.1} parent=23 // pred_region
        %s162 = smul.u32 16, %s17
        %p163 = scmp.lt.s32.totalorder %s162, 63
        %s164 = scalar_select %p163, %s162, 63
        %s165 = smul.addr %s164, 2
        %s166 = smul.addr %s165, 4
        %s167 = scalar_lea.vmem %s0, %s166
        %s168 = smul.u32 16, %s17
      $region28: #{_mm.1} parent=23 // pred_fallthru
        _
    $region24: #{_mm.1} parent=5 // pred_fallthru
      _
    %p169 = scmp.le.s32.totalorder 1, %s9
    %p170 = scmp.lt.s32.totalorder %s9, 5
    %p171 = pnand %p169, %p170
    %p172 = pneg %p171
    // Predicated region
    $region29: #{_mm.1} parent=5 // pred_check
      _
    $region30: #{_mm.1} parent=5 // pred_check_branch
      %174 = sbr.rel (%p171) target = $region32
    $region31: #{_mm.1} parent=5 // pred_region
      %s175 = ssub.s32 %s9, 1
      %s176 = smul.u32 16, %s19
      %p177 = scmp.lt.s32.totalorder %s176, 63
      %s178 = scalar_select %p177, %s176, 63
      %s179 = smul.addr %s178, 2
      %s180 = smul.addr %s179, 4
      %s181 = scalar_lea.vmem %s0, %s180
      %p182 = pneg %p47
      %p183 = pneg %p44
      %p184 = scmp.lt.s32.totalorder %s18, 0
      %s185 = scalar_select %p184, %s18, 0
      %s186 = smul.addr %s185, 4
      %s187 = scalar_lea.vmem %s1, %s186
      %p188 = pneg %p73
      %p189 = pneg %p70
      %p190 = scmp.lt.s32.totalorder %s18, 0
      %s191 = scalar_select %p190, %s18, 0
      %s192 = scalar_lea.vmem %s2, %s191
      %p193 = pneg %p99
      %p194 = pneg %p96
      %p195 = pneg %p127
      %p196 = pneg %p124
      %s197 = smul.u32 16, %s19
      %p198 = scmp.lt.s32.totalorder %s197, 63
      %s199 = scalar_select %p198, %s197, 63
      %p200 = scmp.lt.s32.totalorder %s18, 0
      %s201 = scalar_select %p200, %s18, 0
      %s202 = sadd.s32 %s201, %s199
      %s203 = smul.addr %s202, 4
      %s204 = scalar_lea.vmem %s3, %s203
      %s205 = smul.u32 16, %s19
      %p206 = scmp.lt.s32.totalorder %s205, 63
      %s207 = scalar_select %p206, %s205, 63
      %s208 = smul.addr %s207, 2
      %s209 = smul.addr %s208, 4
      %s210 = scalar_lea.vmem %s0, %s209
      %s211 = smul.u32 16, %s19
      %p212 = scmp.lt.s32.totalorder %s18, 0
      %s213 = scalar_select %p212, %s18, 0
      %s214 = smul.addr %s213, 4
      %s215 = scalar_lea.vmem %s1, %s214
      %p216 = scmp.lt.s32.totalorder %s18, 0
      %s217 = scalar_select %p216, %s18, 0
      %s218 = scalar_lea.vmem %s2, %s217
      %s219 = smul.u32 16, %s19
      %p220 = scmp.lt.s32.totalorder %s219, 63
      %s221 = scalar_select %p220, %s219, 63
      %p222 = scmp.lt.s32.totalorder %s18, 0
      %s223 = scalar_select %p222, %s18, 0
      %s224 = sadd.s32 %s223, %s221
      %s225 = smul.addr %s224, 4
      %s226 = scalar_lea.vmem %s3, %s225
      %s227 = smul.u32 16, %s19
      %v228 = vld [vmem:[%s210] sm:$0xff]
      %v229 = vld [vmem:[%s210 + $0x8] sm:$0xff]
      %v230 = vld [vmem:[%s210 + $0x10] sm:$0xff]
      %v231 = vld [vmem:[%s210 + $0x18] sm:$0xff]
      %v232 = vld [vmem:[%s210 + $0x20] sm:$0xff]
      %v233 = vld [vmem:[%s210 + $0x28] sm:$0xff]
      %v234 = vld [vmem:[%s210 + $0x30] sm:$0xff]
      %v235 = vld [vmem:[%s210 + $0x38] sm:$0xff]
      %v236 = vld [vmem:[%s210 + $0x40] sm:$0xff]
      %v237 = vld [vmem:[%s210 + $0x48] sm:$0xff]
      %v238 = vld [vmem:[%s210 + $0x50] sm:$0xff]
      %v239 = vld [vmem:[%s210 + $0x58] sm:$0xff]
      %v240 = vld [vmem:[%s210 + $0x60] sm:$0xff]
      %v241 = vld [vmem:[%s210 + $0x68] sm:$0xff]
      %v242 = vld [vmem:[%s210 + $0x70] sm:$0xff]
      %v243 = vld [vmem:[%s210 + $0x78] sm:$0xff]
      %v244 = vld [vmem:[%s215] sm:$0xf]
      %v245 = vld [vmem:[%s215 + $0x4] sm:$0xf]
      %v246 = vld [vmem:[%s215 + $0x8] sm:$0xf]
      %v247 = vld [vmem:[%s215 + $0xc] sm:$0xf]
      %v248 = vld [vmem:[%s215 + $0x10] sm:$0xf]
      %v249 = vld [vmem:[%s215 + $0x14] sm:$0xf]
      %v250 = vld [vmem:[%s215 + $0x18] sm:$0xf]
      %v251 = vld [vmem:[%s215 + $0x1c] sm:$0xf]
      %v252 = vld [vmem:[%s215 + $0x20] sm:$0xf]
      %v253 = vld [vmem:[%s215 + $0x24] sm:$0xf]
      %v254 = vld [vmem:[%s215 + $0x28] sm:$0xf]
      %v255 = vld [vmem:[%s215 + $0x2c] sm:$0xf]
      %v256 = vld [vmem:[%s215 + $0x30] sm:$0xf]
      %v257 = vld [vmem:[%s215 + $0x34] sm:$0xf]
      %v258 = vld [vmem:[%s215 + $0x38] sm:$0xf]
      %v259 = vld [vmem:[%s215 + $0x3c] sm:$0xf]
      %v260 = vld [vmem:[%s215 + $0x40] sm:$0xf]
      %v261 = vld [vmem:[%s215 + $0x44] sm:$0xf]
      %v262 = vld [vmem:[%s215 + $0x48] sm:$0xf]
      %v263 = vld [vmem:[%s215 + $0x4c] sm:$0xf]
      %v264 = vld [vmem:[%s215 + $0x50] sm:$0xf]
      %v265 = vld [vmem:[%s215 + $0x54] sm:$0xf]
      %v266 = vld [vmem:[%s215 + $0x58] sm:$0xf]
      %v267 = vld [vmem:[%s215 + $0x5c] sm:$0xf]
      %v268 = vld [vmem:[%s215 + $0x60] sm:$0xf]
      %v269 = vld [vmem:[%s215 + $0x64] sm:$0xf]
      %v270 = vld [vmem:[%s215 + $0x68] sm:$0xf]
      %v271 = vld [vmem:[%s215 + $0x6c] sm:$0xf]
      %v272 = vld [vmem:[%s215 + $0x70] sm:$0xf]
      %v273 = vld [vmem:[%s215 + $0x74] sm:$0xf]
      %v274 = vld [vmem:[%s215 + $0x78] sm:$0xf]
      %v275 = vld [vmem:[%s215 + $0x7c] sm:$0xf]
      %v276 = vld [vmem:[%s218] sm:$0x1]
      %v278 = vperm.slane %v276, 0
      %v296 = vunpack.c.l.b16 %v228
      %v297 = vunpack.c.h.b16 %v228
      %v298 = vunpack.c.l.b16 %v229
      %v299 = vunpack.c.h.b16 %v229
      %v300 = vunpack.c.l.b16 %v230
      %v301 = vunpack.c.h.b16 %v230
      %v302 = vunpack.c.l.b16 %v231
      %v303 = vunpack.c.h.b16 %v231
      %v304 = vunpack.c.l.b16 %v232
      %v305 = vunpack.c.h.b16 %v232
      %v306 = vunpack.c.l.b16 %v233
      %v307 = vunpack.c.h.b16 %v233
      %v308 = vunpack.c.l.b16 %v234
      %v309 = vunpack.c.h.b16 %v234
      %v310 = vunpack.c.l.b16 %v235
      %v311 = vunpack.c.h.b16 %v235
      %v312 = vunpack.c.l.b16 %v236
      %v313 = vunpack.c.h.b16 %v236
      %v314 = vunpack.c.l.b16 %v237
      %v315 = vunpack.c.h.b16 %v237
      %v316 = vunpack.c.l.b16 %v238
      %v317 = vunpack.c.h.b16 %v238
      %v318 = vunpack.c.l.b16 %v239
      %v319 = vunpack.c.h.b16 %v239
      %v320 = vunpack.c.l.b16 %v240
      %v321 = vunpack.c.h.b16 %v240
      %v322 = vunpack.c.l.b16 %v241
      %v323 = vunpack.c.h.b16 %v241
      %v324 = vunpack.c.l.b16 %v242
      %v325 = vunpack.c.h.b16 %v242
      %v326 = vunpack.c.l.b16 %v243
      %v327 = vunpack.c.h.b16 %v243
      %v328 = vpack.c.b16 %v298, %v296
      %v329 = vpack.c.b16 %v299, %v297
      %v330 = vpack.c.b16 %v302, %v300
      %v331 = vpack.c.b16 %v303, %v301
      %v332 = vpack.c.b16 %v306, %v304
      %v333 = vpack.c.b16 %v307, %v305
      %v334 = vpack.c.b16 %v310, %v308
      %v335 = vpack.c.b16 %v311, %v309
      %v336 = vpack.c.b16 %v314, %v312
      %v337 = vpack.c.b16 %v315, %v313
      %v338 = vpack.c.b16 %v318, %v316
      %v339 = vpack.c.b16 %v319, %v317
      %v340 = vpack.c.b16 %v322, %v320
      %v341 = vpack.c.b16 %v323, %v321
      %v342 = vpack.c.b16 %v326, %v324
      %v343 = vpack.c.b16 %v327, %v325
      %v392 = vunpack.c.l.b16 %v244
      %v393 = vunpack.c.l.b16 %v245
      %v394 = vunpack.c.l.b16 %v246
      %v395 = vunpack.c.l.b16 %v247
      %v396 = vunpack.c.l.b16 %v248
      %v397 = vunpack.c.l.b16 %v249
      %v398 = vunpack.c.l.b16 %v250
      %v399 = vunpack.c.l.b16 %v251
      %v400 = vunpack.c.l.b16 %v252
      %v401 = vunpack.c.l.b16 %v253
      %v402 = vunpack.c.l.b16 %v254
      %v403 = vunpack.c.l.b16 %v255
      %v404 = vunpack.c.l.b16 %v256
      %v405 = vunpack.c.l.b16 %v257
      %v406 = vunpack.c.l.b16 %v258
      %v407 = vunpack.c.l.b16 %v259
      %v408 = vunpack.c.l.b16 %v260
      %v409 = vunpack.c.l.b16 %v261
      %v410 = vunpack.c.l.b16 %v262
      %v411 = vunpack.c.l.b16 %v263
      %v412 = vunpack.c.l.b16 %v264
      %v413 = vunpack.c.l.b16 %v265
      %v414 = vunpack.c.l.b16 %v266
      %v415 = vunpack.c.l.b16 %v267
      %v416 = vunpack.c.l.b16 %v268
      %v417 = vunpack.c.l.b16 %v269
      %v418 = vunpack.c.l.b16 %v270
      %v419 = vunpack.c.l.b16 %v271
      %v420 = vunpack.c.l.b16 %v272
      %v421 = vunpack.c.l.b16 %v273
      %v422 = vunpack.c.l.b16 %v274
      %v423 = vunpack.c.l.b16 %v275
      %v424 = vpack.c.b16 %v393, %v392
      %v425 = vpack.c.b16 %v395, %v394
      %v426 = vpack.c.b16 %v397, %v396
      %v427 = vpack.c.b16 %v399, %v398
      %v428 = vpack.c.b16 %v401, %v400
      %v429 = vpack.c.b16 %v403, %v402
      %v430 = vpack.c.b16 %v405, %v404
      %v431 = vpack.c.b16 %v407, %v406
      %v432 = vpack.c.b16 %v409, %v408
      %v433 = vpack.c.b16 %v411, %v410
      %v434 = vpack.c.b16 %v413, %v412
      %v435 = vpack.c.b16 %v415, %v414
      %v436 = vpack.c.b16 %v417, %v416
      %v437 = vpack.c.b16 %v419, %v418
      %v438 = vpack.c.b16 %v421, %v420
      %v439 = vpack.c.b16 %v423, %v422
      %456 = vmatpush.bf16.msra.mxu0 %v431
      %457 = vmatpush.bf16.msra.mxu0 %v430
      %458 = vmatpush.bf16.msra.mxu0 %v429
      %459 = vmatpush.bf16.msra.mxu0 %v428
      %460 = vmatpush.bf16.msra.mxu0 %v427
      %461 = vmatpush.bf16.msra.mxu0 %v426
      %462 = vmatpush.bf16.msra.mxu0 %v425
      %463 = vmatpush.bf16.msra.mxu0 %v424
      %464 = vmatmul.bf16.gmra.mxu0 %v328
      %v465 = vpop.f32.mrf.mxu0
      %v466 = vadd.f32 %v278, %v465
      %v467 = vpop.f32.mrf.mxu0
      %v468 = vadd.f32 %v278, %v467
      %469 = vmatmul.bf16.gmra.mxu0 %v330
      %v470 = vpop.f32.mrf.mxu0
      %v471 = vadd.f32 %v278, %v470
      %v472 = vpop.f32.mrf.mxu0
      %v473 = vadd.f32 %v278, %v472
      %474 = vmatmul.bf16.gmra.mxu0 %v332
      %v475 = vpop.f32.mrf.mxu0
      %v476 = vadd.f32 %v278, %v475
      %v477 = vpop.f32.mrf.mxu0
      %v478 = vadd.f32 %v278, %v477
      %479 = vmatmul.bf16.gmra.mxu0 %v334
      %v480 = vpop.f32.mrf.mxu0
      %v481 = vadd.f32 %v278, %v480
      %v482 = vpop.f32.mrf.mxu0
      %v483 = vadd.f32 %v278, %v482
      %484 = vmatmul.bf16.gmra.mxu0 %v336
      %v485 = vpop.f32.mrf.mxu0
      %v486 = vadd.f32 %v278, %v485
      %v487 = vpop.f32.mrf.mxu0
      %v488 = vadd.f32 %v278, %v487
      %489 = vmatmul.bf16.gmra.mxu0 %v338
      %v490 = vpop.f32.mrf.mxu0
      %v491 = vadd.f32 %v278, %v490
      %v492 = vpop.f32.mrf.mxu0
      %v493 = vadd.f32 %v278, %v492
      %494 = vmatmul.bf16.gmra.mxu0 %v340
      %v495 = vpop.f32.mrf.mxu0
      %v496 = vadd.f32 %v278, %v495
      %v497 = vpop.f32.mrf.mxu0
      %v498 = vadd.f32 %v278, %v497
      %499 = vmatmul.bf16.gmra.mxu0 %v342
      %v500 = vpop.f32.mrf.mxu0
      %v501 = vadd.f32 %v278, %v500
      %v502 = vpop.f32.mrf.mxu0
      %v503 = vadd.f32 %v278, %v502
      %504 = vdwg.mxu0
      %505 = vmatpush.bf16.msra.mxu0 %v439
      %506 = vmatpush.bf16.msra.mxu0 %v438
      %507 = vmatpush.bf16.msra.mxu0 %v437
      %508 = vmatpush.bf16.msra.mxu0 %v436
      %509 = vmatpush.bf16.msra.mxu0 %v435
      %510 = vmatpush.bf16.msra.mxu0 %v434
      %511 = vmatpush.bf16.msra.mxu0 %v433
      %512 = vmatpush.bf16.msra.mxu0 %v432
      %513 = vmatmul.bf16.gmra.mxu0 %v329
      %v514 = vpop.f32.mrf.mxu0
      %v515 = vadd.f32 %v466, %v514
      %v516 = vpop.f32.mrf.mxu0
      %v517 = vadd.f32 %v468, %v516
      %518 = vmatmul.bf16.gmra.mxu0 %v331
      %v519 = vpop.f32.mrf.mxu0
      %v520 = vadd.f32 %v471, %v519
      %v521 = vpop.f32.mrf.mxu0
      %v522 = vadd.f32 %v473, %v521
      %523 = vmatmul.bf16.gmra.mxu0 %v333
      %v524 = vpop.f32.mrf.mxu0
      %v525 = vadd.f32 %v476, %v524
      %v526 = vpop.f32.mrf.mxu0
      %v527 = vadd.f32 %v478, %v526
      %528 = vmatmul.bf16.gmra.mxu0 %v335
      %v529 = vpop.f32.mrf.mxu0
      %v530 = vadd.f32 %v481, %v529
      %v531 = vpop.f32.mrf.mxu0
      %v532 = vadd.f32 %v483, %v531
      %533 = vmatmul.bf16.gmra.mxu0 %v337
      %v534 = vpop.f32.mrf.mxu0
      %v535 = vadd.f32 %v486, %v534
      %v536 = vpop.f32.mrf.mxu0
      %v537 = vadd.f32 %v488, %v536
      %538 = vmatmul.bf16.gmra.mxu0 %v339
      %v539 = vpop.f32.mrf.mxu0
      %v540 = vadd.f32 %v491, %v539
      %v541 = vpop.f32.mrf.mxu0
      %v542 = vadd.f32 %v493, %v541
      %543 = vmatmul.bf16.gmra.mxu0 %v341
      %v544 = vpop.f32.mrf.mxu0
      %v545 = vadd.f32 %v496, %v544
      %v546 = vpop.f32.mrf.mxu0
      %v547 = vadd.f32 %v498, %v546
      %548 = vmatmul.bf16.gmra.mxu0 %v343
      %v549 = vpop.f32.mrf.mxu0
      %v550 = vadd.f32 %v501, %v549
      %v551 = vpop.f32.mrf.mxu0
      %v552 = vadd.f32 %v503, %v551
      %553 = vdwg.mxu0
      %v554 = vmax.f32 %v515, 0.0
      %v555 = vmax.f32 %v517, 0.0
      %v556 = vmax.f32 %v520, 0.0
      %v557 = vmax.f32 %v522, 0.0
      %v558 = vmax.f32 %v525, 0.0
      %v559 = vmax.f32 %v527, 0.0
      %v560 = vmax.f32 %v530, 0.0
      %v561 = vmax.f32 %v532, 0.0
      %v562 = vmax.f32 %v535, 0.0
      %v563 = vmax.f32 %v537, 0.0
      %v564 = vmax.f32 %v540, 0.0
      %v565 = vmax.f32 %v542, 0.0
      %v566 = vmax.f32 %v545, 0.0
      %v567 = vmax.f32 %v547, 0.0
      %v568 = vmax.f32 %v550, 0.0
      %v569 = vmax.f32 %v552, 0.0
      %v570 = vpack.c.bf16 %v554, %v554
      %v571 = vpack.c.bf16 %v555, %v555
      %v572 = vpack.c.bf16 %v556, %v556
      %v573 = vpack.c.bf16 %v557, %v557
      %v574 = vpack.c.bf16 %v558, %v558
      %v575 = vpack.c.bf16 %v559, %v559
      %v576 = vpack.c.bf16 %v560, %v560
      %v577 = vpack.c.bf16 %v561, %v561
      %v578 = vpack.c.bf16 %v562, %v562
      %v579 = vpack.c.bf16 %v563, %v563
      %v580 = vpack.c.bf16 %v564, %v564
      %v581 = vpack.c.bf16 %v565, %v565
      %v582 = vpack.c.bf16 %v566, %v566
      %v583 = vpack.c.bf16 %v567, %v567
      %v584 = vpack.c.bf16 %v568, %v568
      %v585 = vpack.c.bf16 %v569, %v569
      %586 = vst [vmem:[%s226] sm:$0xf] %v570
      %587 = vst [vmem:[%s226 + $0x4] sm:$0xf] %v571
      %588 = vst [vmem:[%s226 + $0x8] sm:$0xf] %v572
      %589 = vst [vmem:[%s226 + $0xc] sm:$0xf] %v573
      %590 = vst [vmem:[%s226 + $0x10] sm:$0xf] %v574
      %591 = vst [vmem:[%s226 + $0x14] sm:$0xf] %v575
      %592 = vst [vmem:[%s226 + $0x18] sm:$0xf] %v576
      %593 = vst [vmem:[%s226 + $0x1c] sm:$0xf] %v577
      %594 = vst [vmem:[%s226 + $0x20] sm:$0xf] %v578
      %595 = vst [vmem:[%s226 + $0x24] sm:$0xf] %v579
      %596 = vst [vmem:[%s226 + $0x28] sm:$0xf] %v580
      %597 = vst [vmem:[%s226 + $0x2c] sm:$0xf] %v581
      %598 = vst [vmem:[%s226 + $0x30] sm:$0xf] %v582
      %599 = vst [vmem:[%s226 + $0x34] sm:$0xf] %v583
      %600 = vst [vmem:[%s226 + $0x38] sm:$0xf] %v584
      %601 = vst [vmem:[%s226 + $0x3c] sm:$0xf] %v585
      %s602 = smul.u32 16, %s19
      %p603 = scmp.lt.s32.totalorder %s602, 63
      %s604 = scalar_select %p603, %s602, 63
      %p605 = scmp.lt.s32.totalorder %s18, 0
      %s606 = scalar_select %p605, %s18, 0
      %s607 = sadd.s32 %s606, %s604
      %s608 = smul.addr %s607, 4
      %s609 = scalar_lea.vmem %s3, %s608
      // Predicated region
      $region33: #{_mm.1} parent=31 // pred_check
        %p610 = pneg %p124
      $region34: #{_mm.1} parent=31 // pred_check_branch
        %612 = sbr.rel (%p610) target = $region36
      $region35: #{_mm.1} parent=31 // pred_region
        %s613 = smul.u32 16, %s19
      $region36: #{_mm.1} parent=31 // pred_fallthru
        _
    $region32: #{_mm.1} parent=5 // pred_fallthru
      _
    %p614 = scmp.le.s32.totalorder 2, %s9
    // Predicated region
    $region37: #{_mm.1} parent=5 // pred_check
      %p615 = pneg %p614
    $region38: #{_mm.1} parent=5 // pred_check_branch
      %617 = sbr.rel (%p615) target = $region40
    $region39: #{_mm.1} parent=5 // pred_region
      %s618 = ssub.s32 %s9, 2
      // Predicated region
      $region41: #{_mm.1} parent=39 // pred_check
        %p619 = pneg %p130
      $region42: #{_mm.1} parent=39 // pred_check_branch
        %621 = sbr.rel (%p619) target = $region44
      $region43: #{_mm.1} parent=39 // pred_region
        %s622 = smul.u32 16, %s21
        %p623 = scmp.lt.s32.totalorder %s622, 63
        %s624 = scalar_select %p623, %s622, 63
        %p625 = scmp.lt.s32.totalorder %s20, 0
        %s626 = scalar_select %p625, %s20, 0
        %s627 = sadd.s32 %s626, %s624
        %s628 = smul.addr %s627, 4
        %s629 = scalar_lea.vmem %s3, %s628
      $region44: #{_mm.1} parent=39 // pred_fallthru
        _
    $region40: #{_mm.1} parent=5 // pred_fallthru
      _
  $region6: #{_mm.1} parent=0 // loop_footer
    %s13 = sadd.s32 1, %s9
  $region7: #{_mm.1} parent=0 // loop_footer_branch
    %8 = sbr.rel target = $region3
  $region8: #{_mm.1} parent=0 // loop_exit
    _

</llo_original>
